<compile_context>
chip_gen: v7x
topology: tpu7x:2x2x1
jax: 0.10.0
libtpu: 0.0.40
codegen_flags: <defaults>
</compile_context>

<pallas_src>
import functools

import jax
import jax.numpy as jnp
from jax import lax
from jax.experimental import pallas as pl
from jax.experimental.pallas import tpu as pltpu


# ---------------------------------------------------------------------------
# Kernel
# ---------------------------------------------------------------------------
def _shortcut_a_kernel(x_ref, o_ref, *, c_in, ch_pad, ho, wo, shift_bits):
    # x_ref: (nb, c_in,  h*w)     lane-dense NCHW view of the input block
    # o_ref: (nb, c_out, ho*wo)   lane-dense NCHW view of the output block
    nb, _, n_lanes = x_ref.shape
    lane = lax.broadcasted_iota(jnp.int32, (1, 1, n_lanes), 2)

    # Lane-compaction network.  Each step k: rotate left by 2**k and select
    # into the lanes whose index has bit k set and bit k+1 clear (the standard
    # factor-2 compaction step, applied at element / w-block / wo-block
    # granularity — the bit schedule is precomputed in _compaction_bits).
    # One XLU-class rotate + one VPU select per step, all lanes useful.
    cur = x_ref[...]
    for k in shift_bits:
        s = 1 << k
        dest = (((lane >> k) & 1) == 1) & (((lane >> (k + 1)) & 1) == 0)
        rotated = jnp.concatenate([cur[..., s:], cur[..., :s]], axis=-1)
        cur = jnp.where(dest, rotated, cur)

    sub = cur[..., : ho * wo].astype(o_ref.dtype)        # (nb, c_in, ho*wo)

    # Channel zero-pad: three disjoint sublane-range stores (no concat
    # assembly).  For the real ResNet-CIFAR transitions ch_pad is 8 or 16, so
    # the boundaries are 8-sublane aligned and the stores are unmasked.
    if ch_pad:
        zeros = jnp.zeros((nb, ch_pad, ho * wo), o_ref.dtype)
        o_ref[:, :ch_pad, :] = zeros
        o_ref[:, ch_pad + c_in:, :] = zeros
    o_ref[:, ch_pad:ch_pad + c_in, :] = sub


def _compaction_bits(h, w):
    """Bit schedule for the in-lane stride-2 subsample of an (h, w) row-major
    lane dimension (h, w powers of two).

    Stage 1  (bits 0 .. log2(wo)-1): within every w-sized lane block, compact
      the even elements into the first wo lanes (W subsample).
    Stage 2a (bits log2(w) ..): keep the even w-sized blocks (H subsample);
      row i's data lands at lanes [i*w, i*w + wo).
    Stage 2b (bits log2(wo) ..): keep the even wo-sized blocks; rows pack
      contiguously so the result occupies lanes [0, ho*wo).
    """
    ho, wo = h // 2, w // 2
    log2w = w.bit_length() - 1
    log2wo = max(wo.bit_length() - 1, 0)
    bits = list(range((wo - 1).bit_length()))                     # stage 1
    bits += [log2w + b for b in range((ho - 1).bit_length())]     # stage 2a
    bits += [log2wo + b for b in range((ho - 1).bit_length())]    # stage 2b
    return tuple(bits)


# ---------------------------------------------------------------------------
# Block sizing (VMEM-padding aware, per-generation budget)
# ---------------------------------------------------------------------------
def _round_up(x, m):
    return -(-x // m) * m


def _padded_tile_bytes(rows, lanes, itemsize):
    sub = max(8, 32 // itemsize)                    # sublane packing granule
    return _round_up(rows, sub) * _round_up(lanes, 128) * itemsize


def _vmem_budget_and_limit():
    try:
        cap = int(pltpu.get_tpu_info().vmem_capacity_bytes)
    except Exception:                               # non-TPU host / API drift
        cap = 64 * 1024 * 1024                      # conservative (v7x per-TC)
    # ~1/8 of physical VMEM for the pipelined blocks + temporaries; scoped
    # limit at half of physical (>= the default on every generation).
    return cap // 8, min(cap // 2, 64 * 1024 * 1024)


def _pick_batch_block(n, per_image_bytes, budget_bytes):
    """Images per grid step: fit the VMEM budget, keep >= 2 grid steps
    (pipelining + both v7x TensorCores), prefer an even step count, and prefer
    an exact divisor of n (no clipped tail) when one is close to the cap."""
    if n <= 1:
        return 1
    cap = max(1, min(int(budget_bytes) // max(int(per_image_bytes), 1), n // 2))
    divisors = [d for d in range(1, cap + 1) if n % d == 0]
    even_divs = [d for d in divisors if (n // d) % 2 == 0]
    best_exact = max(even_divs) if even_divs else max(divisors)
    if best_exact * 2 >= cap:
        return best_exact
    # No good divisor (e.g. prime n): clipped tail block, even step count.
    steps = -(-n // cap)
    steps += steps % 2
    return max(1, -(-n // steps))


# ---------------------------------------------------------------------------
# Wrapper
# ---------------------------------------------------------------------------
def _reference(x, planes):
    pad = planes // 4
    return jnp.pad(x[:, :, ::2, ::2],
                   ((0, 0), (pad, pad), (0, 0), (0, 0)),
                   mode="constant", constant_values=0)


def lambda_layer_shortcut_a(x_nchw, planes, *, batch_block=None):
    """Pallas implementation of LambdaLayer(option-A shortcut).

    Args:
      x_nchw: input in PyTorch NCHW layout, shape (N, C, H, W).
      planes: target plane count; zero-pad is planes // 4 channels per side.
    Returns:
      NCHW tensor of shape (N, C + 2*(planes//4), H//2, W//2).
    """
    n, c, h, w = x_nchw.shape
    ch_pad = planes // 4
    c_out = c + 2 * ch_pad
    ho, wo = h // 2, w // 2

    def _pow2(v):
        return v >= 2 and (v & (v - 1)) == 0

    if not (_pow2(h) and _pow2(w)):
        # ResNet-CIFAR only sees 32x32 / 16x16 / 8x8 feature maps; anything
        # else takes the plain-XLA path (which XLA can fuse into neighbours).
        return _reference(x_nchw, planes)

    x_view = x_nchw.reshape(n, c, h * w)            # free metadata reshape

    itemsize = jnp.dtype(x_nchw.dtype).itemsize
    in_img = _padded_tile_bytes(c, h * w, itemsize)
    out_img = _padded_tile_bytes(c_out, ho * wo, itemsize)
    # 2x double-buffered input + ~3 block-sized compaction temporaries,
    # plus the 2x double-buffered output.
    per_image = 5 * in_img + 2 * out_img
    budget, vmem_limit = _vmem_budget_and_limit()
    nb = batch_block or _pick_batch_block(n, per_image, budget)
    grid = (pl.cdiv(n, nb),)

    kernel = functools.partial(
        _shortcut_a_kernel, c_in=c, ch_pad=ch_pad, ho=ho, wo=wo,
        shift_bits=_compaction_bits(h, w))

    out_view = pl.pallas_call(
        kernel,
        out_shape=jax.ShapeDtypeStruct((n, c_out, ho * wo), x_nchw.dtype),
        grid_spec=pltpu.PrefetchScalarGridSpec(
            num_scalar_prefetch=0,
            grid=grid,
            in_specs=[pl.BlockSpec((nb, c, h * w), lambda i: (i, 0, 0))],
            out_specs=pl.BlockSpec((nb, c_out, ho * wo), lambda i: (i, 0, 0)),
        ),
        compiler_params=pltpu.CompilerParams(
            dimension_semantics=("parallel",),
            vmem_limit_bytes=vmem_limit,
        ),
    )(x_view)

    return out_view.reshape(n, c_out, ho, wo)       # free view back to NCHW


# ---------------------------------------------------------------------------
# Self-test
# ---------------------------------------------------------------------------
if __name__ == "__main__":
    key = jax.random.PRNGKey(0)

    # Small demo shape consistent with the module's conv-feature inputs (NCHW).
    x = jax.random.normal(key, (2, 4, 16, 16), dtype=jnp.float32)
    planes = 8                                  # pad = planes // 4 = 2
    out = jax.block_until_ready(lambda_layer_shortcut_a(x, planes))
    ref = _reference(x, planes)
    assert out.shape == ref.shape, (out.shape, ref.shape)
    assert out.dtype == ref.dtype
    assert bool(jnp.array_equal(out, ref)), "kernel mismatch vs reference (case 1)"

    # CIFAR-realistic 16 -> 32 plane transition (32x32 spatial): 8-aligned
    # channel-pad stores, the full 12-step compaction, multi-image blocks.
    x2 = jax.random.normal(jax.random.PRNGKey(0), (4, 16, 32, 32), dtype=jnp.float32)
    out2 = jax.block_until_ready(lambda_layer_shortcut_a(x2, 32))
    ref2 = _reference(x2, 32)
    assert out2.shape == ref2.shape, (out2.shape, ref2.shape)
    assert bool(jnp.array_equal(out2, ref2)), "kernel mismatch vs reference (case 2)"

    print("KERNEL_OK")
</pallas_src>

<mosaic_0001>
module attributes {stable_mosaic.version = 11 : i64} {
  func.func @_shortcut_a_kernel(%arg0: i32, %arg1: memref<1x4x256xf32, #tpu.memory_space<vmem>>, %arg2: memref<1x8x64xf32, #tpu.memory_space<vmem>>) attributes {dimension_semantics = [#tpu.dimension_semantics<parallel>], iteration_bounds = array<i64: 2>, scalar_prefetch = 0 : i64, scratch_operands = 0 : i64, tpu.core_type = #tpu.core_type<tc>, window_params = [{transform_indices = @transform_0, window_bounds = array<i64: 1, 4, 256>}, {transform_indices = @transform_1, window_bounds = array<i64: 1, 8, 64>}]} {
    %0 = tpu.iota {dimensions = array<i32: 2>} : vector<1x1x256xi32>
    %c0 = arith.constant 0 : index
    %c0_0 = arith.constant 0 : index
    %c0_1 = arith.constant 0 : index
    %1 = vector.load %arg1[%c0, %c0_0, %c0_1] : memref<1x4x256xf32, #tpu.memory_space<vmem>>, vector<1x4x256xf32>
    %c0_i32 = arith.constant 0 : i32
    %2 = vector.broadcast %c0_i32 : i32 to vector<1x1x256xi32>
    %3 = arith.shrsi %0, %2 : vector<1x1x256xi32>
    %c1_i32 = arith.constant 1 : i32
    %4 = vector.broadcast %c1_i32 : i32 to vector<1x1x256xi32>
    %5 = arith.andi %3, %4 : vector<1x1x256xi32>
    %c1_i32_2 = arith.constant 1 : i32
    %6 = vector.broadcast %c1_i32_2 : i32 to vector<1x1x256xi32>
    %7 = arith.cmpi eq, %5, %6 : vector<1x1x256xi32>
    %c1_i32_3 = arith.constant 1 : i32
    %8 = vector.broadcast %c1_i32_3 : i32 to vector<1x1x256xi32>
    %9 = arith.shrsi %0, %8 : vector<1x1x256xi32>
    %c1_i32_4 = arith.constant 1 : i32
    %10 = vector.broadcast %c1_i32_4 : i32 to vector<1x1x256xi32>
    %11 = arith.andi %9, %10 : vector<1x1x256xi32>
    %c0_i32_5 = arith.constant 0 : i32
    %12 = vector.broadcast %c0_i32_5 : i32 to vector<1x1x256xi32>
    %13 = arith.cmpi eq, %11, %12 : vector<1x1x256xi32>
    %14 = arith.andi %7, %13 : vector<1x1x256xi1>
    %15 = vector.extract_strided_slice %1 {offsets = [0, 0, 1], sizes = [1, 4, 255], strides = [1, 1, 1]} : vector<1x4x256xf32> to vector<1x4x255xf32>
    %16 = vector.extract_strided_slice %1 {offsets = [0, 0, 0], sizes = [1, 4, 1], strides = [1, 1, 1]} : vector<1x4x256xf32> to vector<1x4x1xf32>
    %17 = tpu.concatenate %15, %16 in 2 : vector<1x4x255xf32>, vector<1x4x1xf32> -> vector<1x4x256xf32>
    %18 = vector.shape_cast %14 : vector<1x1x256xi1> to vector<1x1x256xi1>
    %19 = vector.broadcast %18 : vector<1x1x256xi1> to vector<1x4x256xi1>
    %20 = arith.select %19, %17, %1 : vector<1x4x256xi1>, vector<1x4x256xf32>
    %c1_i32_6 = arith.constant 1 : i32
    %21 = vector.broadcast %c1_i32_6 : i32 to vector<1x1x256xi32>
    %22 = arith.shrsi %0, %21 : vector<1x1x256xi32>
    %c1_i32_7 = arith.constant 1 : i32
    %23 = vector.broadcast %c1_i32_7 : i32 to vector<1x1x256xi32>
    %24 = arith.andi %22, %23 : vector<1x1x256xi32>
    %c1_i32_8 = arith.constant 1 : i32
    %25 = vector.broadcast %c1_i32_8 : i32 to vector<1x1x256xi32>
    %26 = arith.cmpi eq, %24, %25 : vector<1x1x256xi32>
    %c2_i32 = arith.constant 2 : i32
    %27 = vector.broadcast %c2_i32 : i32 to vector<1x1x256xi32>
    %28 = arith.shrsi %0, %27 : vector<1x1x256xi32>
    %c1_i32_9 = arith.constant 1 : i32
    %29 = vector.broadcast %c1_i32_9 : i32 to vector<1x1x256xi32>
    %30 = arith.andi %28, %29 : vector<1x1x256xi32>
    %c0_i32_10 = arith.constant 0 : i32
    %31 = vector.broadcast %c0_i32_10 : i32 to vector<1x1x256xi32>
    %32 = arith.cmpi eq, %30, %31 : vector<1x1x256xi32>
    %33 = arith.andi %26, %32 : vector<1x1x256xi1>
    %34 = vector.extract_strided_slice %20 {offsets = [0, 0, 2], sizes = [1, 4, 254], strides = [1, 1, 1]} : vector<1x4x256xf32> to vector<1x4x254xf32>
    %35 = vector.extract_strided_slice %20 {offsets = [0, 0, 0], sizes = [1, 4, 2], strides = [1, 1, 1]} : vector<1x4x256xf32> to vector<1x4x2xf32>
    %36 = tpu.concatenate %34, %35 in 2 : vector<1x4x254xf32>, vector<1x4x2xf32> -> vector<1x4x256xf32>
    %37 = vector.shape_cast %33 : vector<1x1x256xi1> to vector<1x1x256xi1>
    %38 = vector.broadcast %37 : vector<1x1x256xi1> to vector<1x4x256xi1>
    %39 = arith.select %38, %36, %20 : vector<1x4x256xi1>, vector<1x4x256xf32>
    %c2_i32_11 = arith.constant 2 : i32
    %40 = vector.broadcast %c2_i32_11 : i32 to vector<1x1x256xi32>
    %41 = arith.shrsi %0, %40 : vector<1x1x256xi32>
    %c1_i32_12 = arith.constant 1 : i32
    %42 = vector.broadcast %c1_i32_12 : i32 to vector<1x1x256xi32>
    %43 = arith.andi %41, %42 : vector<1x1x256xi32>
    %c1_i32_13 = arith.constant 1 : i32
    %44 = vector.broadcast %c1_i32_13 : i32 to vector<1x1x256xi32>
    %45 = arith.cmpi eq, %43, %44 : vector<1x1x256xi32>
    %c3_i32 = arith.constant 3 : i32
    %46 = vector.broadcast %c3_i32 : i32 to vector<1x1x256xi32>
    %47 = arith.shrsi %0, %46 : vector<1x1x256xi32>
    %c1_i32_14 = arith.constant 1 : i32
    %48 = vector.broadcast %c1_i32_14 : i32 to vector<1x1x256xi32>
    %49 = arith.andi %47, %48 : vector<1x1x256xi32>
    %c0_i32_15 = arith.constant 0 : i32
    %50 = vector.broadcast %c0_i32_15 : i32 to vector<1x1x256xi32>
    %51 = arith.cmpi eq, %49, %50 : vector<1x1x256xi32>
    %52 = arith.andi %45, %51 : vector<1x1x256xi1>
    %53 = vector.extract_strided_slice %39 {offsets = [0, 0, 4], sizes = [1, 4, 252], strides = [1, 1, 1]} : vector<1x4x256xf32> to vector<1x4x252xf32>
    %54 = vector.extract_strided_slice %39 {offsets = [0, 0, 0], sizes = [1, 4, 4], strides = [1, 1, 1]} : vector<1x4x256xf32> to vector<1x4x4xf32>
    %55 = tpu.concatenate %53, %54 in 2 : vector<1x4x252xf32>, vector<1x4x4xf32> -> vector<1x4x256xf32>
    %56 = vector.shape_cast %52 : vector<1x1x256xi1> to vector<1x1x256xi1>
    %57 = vector.broadcast %56 : vector<1x1x256xi1> to vector<1x4x256xi1>
    %58 = arith.select %57, %55, %39 : vector<1x4x256xi1>, vector<1x4x256xf32>
    %c4_i32 = arith.constant 4 : i32
    %59 = vector.broadcast %c4_i32 : i32 to vector<1x1x256xi32>
    %60 = arith.shrsi %0, %59 : vector<1x1x256xi32>
    %c1_i32_16 = arith.constant 1 : i32
    %61 = vector.broadcast %c1_i32_16 : i32 to vector<1x1x256xi32>
    %62 = arith.andi %60, %61 : vector<1x1x256xi32>
    %c1_i32_17 = arith.constant 1 : i32
    %63 = vector.broadcast %c1_i32_17 : i32 to vector<1x1x256xi32>
    %64 = arith.cmpi eq, %62, %63 : vector<1x1x256xi32>
    %c5_i32 = arith.constant 5 : i32
    %65 = vector.broadcast %c5_i32 : i32 to vector<1x1x256xi32>
    %66 = arith.shrsi %0, %65 : vector<1x1x256xi32>
    %c1_i32_18 = arith.constant 1 : i32
    %67 = vector.broadcast %c1_i32_18 : i32 to vector<1x1x256xi32>
    %68 = arith.andi %66, %67 : vector<1x1x256xi32>
    %c0_i32_19 = arith.constant 0 : i32
    %69 = vector.broadcast %c0_i32_19 : i32 to vector<1x1x256xi32>
    %70 = arith.cmpi eq, %68, %69 : vector<1x1x256xi32>
    %71 = arith.andi %64, %70 : vector<1x1x256xi1>
    %72 = vector.extract_strided_slice %58 {offsets = [0, 0, 16], sizes = [1, 4, 240], strides = [1, 1, 1]} : vector<1x4x256xf32> to vector<1x4x240xf32>
    %73 = vector.extract_strided_slice %58 {offsets = [0, 0, 0], sizes = [1, 4, 16], strides = [1, 1, 1]} : vector<1x4x256xf32> to vector<1x4x16xf32>
    %74 = tpu.concatenate %72, %73 in 2 : vector<1x4x240xf32>, vector<1x4x16xf32> -> vector<1x4x256xf32>
    %75 = vector.shape_cast %71 : vector<1x1x256xi1> to vector<1x1x256xi1>
    %76 = vector.broadcast %75 : vector<1x1x256xi1> to vector<1x4x256xi1>
    %77 = arith.select %76, %74, %58 : vector<1x4x256xi1>, vector<1x4x256xf32>
    %c5_i32_20 = arith.constant 5 : i32
    %78 = vector.broadcast %c5_i32_20 : i32 to vector<1x1x256xi32>
    %79 = arith.shrsi %0, %78 : vector<1x1x256xi32>
    %c1_i32_21 = arith.constant 1 : i32
    %80 = vector.broadcast %c1_i32_21 : i32 to vector<1x1x256xi32>
    %81 = arith.andi %79, %80 : vector<1x1x256xi32>
    %c1_i32_22 = arith.constant 1 : i32
    %82 = vector.broadcast %c1_i32_22 : i32 to vector<1x1x256xi32>
    %83 = arith.cmpi eq, %81, %82 : vector<1x1x256xi32>
    %c6_i32 = arith.constant 6 : i32
    %84 = vector.broadcast %c6_i32 : i32 to vector<1x1x256xi32>
    %85 = arith.shrsi %0, %84 : vector<1x1x256xi32>
    %c1_i32_23 = arith.constant 1 : i32
    %86 = vector.broadcast %c1_i32_23 : i32 to vector<1x1x256xi32>
    %87 = arith.andi %85, %86 : vector<1x1x256xi32>
    %c0_i32_24 = arith.constant 0 : i32
    %88 = vector.broadcast %c0_i32_24 : i32 to vector<1x1x256xi32>
    %89 = arith.cmpi eq, %87, %88 : vector<1x1x256xi32>
    %90 = arith.andi %83, %89 : vector<1x1x256xi1>
    %91 = vector.extract_strided_slice %77 {offsets = [0, 0, 32], sizes = [1, 4, 224], strides = [1, 1, 1]} : vector<1x4x256xf32> to vector<1x4x224xf32>
    %92 = vector.extract_strided_slice %77 {offsets = [0, 0, 0], sizes = [1, 4, 32], strides = [1, 1, 1]} : vector<1x4x256xf32> to vector<1x4x32xf32>
    %93 = tpu.concatenate %91, %92 in 2 : vector<1x4x224xf32>, vector<1x4x32xf32> -> vector<1x4x256xf32>
    %94 = vector.shape_cast %90 : vector<1x1x256xi1> to vector<1x1x256xi1>
    %95 = vector.broadcast %94 : vector<1x1x256xi1> to vector<1x4x256xi1>
    %96 = arith.select %95, %93, %77 : vector<1x4x256xi1>, vector<1x4x256xf32>
    %c6_i32_25 = arith.constant 6 : i32
    %97 = vector.broadcast %c6_i32_25 : i32 to vector<1x1x256xi32>
    %98 = arith.shrsi %0, %97 : vector<1x1x256xi32>
    %c1_i32_26 = arith.constant 1 : i32
    %99 = vector.broadcast %c1_i32_26 : i32 to vector<1x1x256xi32>
    %100 = arith.andi %98, %99 : vector<1x1x256xi32>
    %c1_i32_27 = arith.constant 1 : i32
    %101 = vector.broadcast %c1_i32_27 : i32 to vector<1x1x256xi32>
    %102 = arith.cmpi eq, %100, %101 : vector<1x1x256xi32>
    %c7_i32 = arith.constant 7 : i32
    %103 = vector.broadcast %c7_i32 : i32 to vector<1x1x256xi32>
    %104 = arith.shrsi %0, %103 : vector<1x1x256xi32>
    %c1_i32_28 = arith.constant 1 : i32
    %105 = vector.broadcast %c1_i32_28 : i32 to vector<1x1x256xi32>
    %106 = arith.andi %104, %105 : vector<1x1x256xi32>
    %c0_i32_29 = arith.constant 0 : i32
    %107 = vector.broadcast %c0_i32_29 : i32 to vector<1x1x256xi32>
    %108 = arith.cmpi eq, %106, %107 : vector<1x1x256xi32>
    %109 = arith.andi %102, %108 : vector<1x1x256xi1>
    %110 = vector.extract_strided_slice %96 {offsets = [0, 0, 64], sizes = [1, 4, 192], strides = [1, 1, 1]} : vector<1x4x256xf32> to vector<1x4x192xf32>
    %111 = vector.extract_strided_slice %96 {offsets = [0, 0, 0], sizes = [1, 4, 64], strides = [1, 1, 1]} : vector<1x4x256xf32> to vector<1x4x64xf32>
    %112 = tpu.concatenate %110, %111 in 2 : vector<1x4x192xf32>, vector<1x4x64xf32> -> vector<1x4x256xf32>
    %113 = vector.shape_cast %109 : vector<1x1x256xi1> to vector<1x1x256xi1>
    %114 = vector.broadcast %113 : vector<1x1x256xi1> to vector<1x4x256xi1>
    %115 = arith.select %114, %112, %96 : vector<1x4x256xi1>, vector<1x4x256xf32>
    %c3_i32_30 = arith.constant 3 : i32
    %116 = vector.broadcast %c3_i32_30 : i32 to vector<1x1x256xi32>
    %117 = arith.shrsi %0, %116 : vector<1x1x256xi32>
    %c1_i32_31 = arith.constant 1 : i32
    %118 = vector.broadcast %c1_i32_31 : i32 to vector<1x1x256xi32>
    %119 = arith.andi %117, %118 : vector<1x1x256xi32>
    %c1_i32_32 = arith.constant 1 : i32
    %120 = vector.broadcast %c1_i32_32 : i32 to vector<1x1x256xi32>
    %121 = arith.cmpi eq, %119, %120 : vector<1x1x256xi32>
    %c4_i32_33 = arith.constant 4 : i32
    %122 = vector.broadcast %c4_i32_33 : i32 to vector<1x1x256xi32>
    %123 = arith.shrsi %0, %122 : vector<1x1x256xi32>
    %c1_i32_34 = arith.constant 1 : i32
    %124 = vector.broadcast %c1_i32_34 : i32 to vector<1x1x256xi32>
    %125 = arith.andi %123, %124 : vector<1x1x256xi32>
    %c0_i32_35 = arith.constant 0 : i32
    %126 = vector.broadcast %c0_i32_35 : i32 to vector<1x1x256xi32>
    %127 = arith.cmpi eq, %125, %126 : vector<1x1x256xi32>
    %128 = arith.andi %121, %127 : vector<1x1x256xi1>
    %129 = vector.extract_strided_slice %115 {offsets = [0, 0, 8], sizes = [1, 4, 248], strides = [1, 1, 1]} : vector<1x4x256xf32> to vector<1x4x248xf32>
    %130 = vector.extract_strided_slice %115 {offsets = [0, 0, 0], sizes = [1, 4, 8], strides = [1, 1, 1]} : vector<1x4x256xf32> to vector<1x4x8xf32>
    %131 = tpu.concatenate %129, %130 in 2 : vector<1x4x248xf32>, vector<1x4x8xf32> -> vector<1x4x256xf32>
    %132 = vector.shape_cast %128 : vector<1x1x256xi1> to vector<1x1x256xi1>
    %133 = vector.broadcast %132 : vector<1x1x256xi1> to vector<1x4x256xi1>
    %134 = arith.select %133, %131, %115 : vector<1x4x256xi1>, vector<1x4x256xf32>
    %c4_i32_36 = arith.constant 4 : i32
    %135 = vector.broadcast %c4_i32_36 : i32 to vector<1x1x256xi32>
    %136 = arith.shrsi %0, %135 : vector<1x1x256xi32>
    %c1_i32_37 = arith.constant 1 : i32
    %137 = vector.broadcast %c1_i32_37 : i32 to vector<1x1x256xi32>
    %138 = arith.andi %136, %137 : vector<1x1x256xi32>
    %c1_i32_38 = arith.constant 1 : i32
    %139 = vector.broadcast %c1_i32_38 : i32 to vector<1x1x256xi32>
    %140 = arith.cmpi eq, %138, %139 : vector<1x1x256xi32>
    %c5_i32_39 = arith.constant 5 : i32
    %141 = vector.broadcast %c5_i32_39 : i32 to vector<1x1x256xi32>
    %142 = arith.shrsi %0, %141 : vector<1x1x256xi32>
    %c1_i32_40 = arith.constant 1 : i32
    %143 = vector.broadcast %c1_i32_40 : i32 to vector<1x1x256xi32>
    %144 = arith.andi %142, %143 : vector<1x1x256xi32>
    %c0_i32_41 = arith.constant 0 : i32
    %145 = vector.broadcast %c0_i32_41 : i32 to vector<1x1x256xi32>
    %146 = arith.cmpi eq, %144, %145 : vector<1x1x256xi32>
    %147 = arith.andi %140, %146 : vector<1x1x256xi1>
    %148 = vector.extract_strided_slice %134 {offsets = [0, 0, 16], sizes = [1, 4, 240], strides = [1, 1, 1]} : vector<1x4x256xf32> to vector<1x4x240xf32>
    %149 = vector.extract_strided_slice %134 {offsets = [0, 0, 0], sizes = [1, 4, 16], strides = [1, 1, 1]} : vector<1x4x256xf32> to vector<1x4x16xf32>
    %150 = tpu.concatenate %148, %149 in 2 : vector<1x4x240xf32>, vector<1x4x16xf32> -> vector<1x4x256xf32>
    %151 = vector.shape_cast %147 : vector<1x1x256xi1> to vector<1x1x256xi1>
    %152 = vector.broadcast %151 : vector<1x1x256xi1> to vector<1x4x256xi1>
    %153 = arith.select %152, %150, %134 : vector<1x4x256xi1>, vector<1x4x256xf32>
    %c5_i32_42 = arith.constant 5 : i32
    %154 = vector.broadcast %c5_i32_42 : i32 to vector<1x1x256xi32>
    %155 = arith.shrsi %0, %154 : vector<1x1x256xi32>
    %c1_i32_43 = arith.constant 1 : i32
    %156 = vector.broadcast %c1_i32_43 : i32 to vector<1x1x256xi32>
    %157 = arith.andi %155, %156 : vector<1x1x256xi32>
    %c1_i32_44 = arith.constant 1 : i32
    %158 = vector.broadcast %c1_i32_44 : i32 to vector<1x1x256xi32>
    %159 = arith.cmpi eq, %157, %158 : vector<1x1x256xi32>
    %c6_i32_45 = arith.constant 6 : i32
    %160 = vector.broadcast %c6_i32_45 : i32 to vector<1x1x256xi32>
    %161 = arith.shrsi %0, %160 : vector<1x1x256xi32>
    %c1_i32_46 = arith.constant 1 : i32
    %162 = vector.broadcast %c1_i32_46 : i32 to vector<1x1x256xi32>
    %163 = arith.andi %161, %162 : vector<1x1x256xi32>
    %c0_i32_47 = arith.constant 0 : i32
    %164 = vector.broadcast %c0_i32_47 : i32 to vector<1x1x256xi32>
    %165 = arith.cmpi eq, %163, %164 : vector<1x1x256xi32>
    %166 = arith.andi %159, %165 : vector<1x1x256xi1>
    %167 = vector.extract_strided_slice %153 {offsets = [0, 0, 32], sizes = [1, 4, 224], strides = [1, 1, 1]} : vector<1x4x256xf32> to vector<1x4x224xf32>
    %168 = vector.extract_strided_slice %153 {offsets = [0, 0, 0], sizes = [1, 4, 32], strides = [1, 1, 1]} : vector<1x4x256xf32> to vector<1x4x32xf32>
    %169 = tpu.concatenate %167, %168 in 2 : vector<1x4x224xf32>, vector<1x4x32xf32> -> vector<1x4x256xf32>
    %170 = vector.shape_cast %166 : vector<1x1x256xi1> to vector<1x1x256xi1>
    %171 = vector.broadcast %170 : vector<1x1x256xi1> to vector<1x4x256xi1>
    %172 = arith.select %171, %169, %153 : vector<1x4x256xi1>, vector<1x4x256xf32>
    %173 = vector.extract_strided_slice %172 {offsets = [0, 0, 0], sizes = [1, 4, 64], strides = [1, 1, 1]} : vector<1x4x256xf32> to vector<1x4x64xf32>
    %cst = arith.constant 0.000000e+00 : f32
    %174 = vector.broadcast %cst : f32 to vector<1x2x64xf32>
    %c0_48 = arith.constant 0 : index
    %c0_49 = arith.constant 0 : index
    %c0_50 = arith.constant 0 : index
    %175 = vector.load %arg2[%c0_48, %c0_49, %c0_50] : memref<1x8x64xf32, #tpu.memory_space<vmem>>, vector<1x2x64xf32>
    tpu.vector_store %arg2[%c0_48, %c0_49, %c0_50], %174 {strides = array<i32>} : memref<1x8x64xf32, #tpu.memory_space<vmem>>, vector<1x2x64xf32>,
    %c0_51 = arith.constant 0 : index
    %c6 = arith.constant 6 : index
    %c0_52 = arith.constant 0 : index
    %176 = vector.load %arg2[%c0_51, %c6, %c0_52] : memref<1x8x64xf32, #tpu.memory_space<vmem>>, vector<1x2x64xf32>
    tpu.vector_store %arg2[%c0_51, %c6, %c0_52], %174 {strides = array<i32>} : memref<1x8x64xf32, #tpu.memory_space<vmem>>, vector<1x2x64xf32>,
    %c0_53 = arith.constant 0 : index
    %c2 = arith.constant 2 : index
    %c0_54 = arith.constant 0 : index
    %177 = vector.load %arg2[%c0_53, %c2, %c0_54] : memref<1x8x64xf32, #tpu.memory_space<vmem>>, vector<1x4x64xf32>
    tpu.vector_store %arg2[%c0_53, %c2, %c0_54], %173 {strides = array<i32>} : memref<1x8x64xf32, #tpu.memory_space<vmem>>, vector<1x4x64xf32>,
    return
  }
  func.func @transform_0(%arg0: i32) -> (i32, i32, i32) {
    %c0_i32 = arith.constant 0 : i32
    %c0_i32_0 = arith.constant 0 : i32
    %c0_i32_1 = arith.constant 0 : i32
    return %arg0, %c0_i32, %c0_i32_0 : i32, i32, i32
  }
  func.func @transform_1(%arg0: i32) -> (i32, i32, i32) {
    %c0_i32 = arith.constant 0 : i32
    %c0_i32_0 = arith.constant 0 : i32
    %c0_i32_1 = arith.constant 0 : i32
    return %arg0, %c0_i32, %c0_i32_0 : i32, i32, i32
  }
}

</mosaic_0001>

<llo_original>
// kernel: tpu_custom_call.1
$region0: #{tpu_custom_call.1}
  #allocation0 [shape = 'u32[]', space=smem, size = 0x4, offset = 0x4, fixed_abs, tag = 'smem constant byte address 0x4 - core index']
  #allocation1 [shape = 'u32[144,128]{1,0:T(1,128)}', space=vmem, size = 0x12000, scoped, tag = 'internal scratch']
  %s0 = inlined_call_operand.hbm [shape: f32[2,4,256], index: 0, kind: input, shape index: {}]
  %s1 = inlined_call_operand.hbm [shape: f32[2,8,64], index: 1, kind: output, shape index: {}]
  %s2 = sld [smem:[#allocation0]]
  $region41: #{tpu_custom_call.1} parent=0
    _
  %s4 = ssub.s32 1, %s2
  %s5 = scalar_select 0, %s4, %s2
  $region1: #{tpu_custom_call.1} parent=0
    #allocation2 [shape = 'u8[8192]{0}', space=vmem, size = 0x2000, scoped, tag = 'input window, operand 0']
    #allocation3 [shape = 's32[2]{0}', space=sflag, size = 0x8, scoped, tag = 'scoped memory for tpu_custom_call.1']
    #allocation4 [shape = 's32[2]{0}', space=sflag, size = 0x8, scoped, tag = 'scoped memory for tpu_custom_call.1']
    #allocation5 [shape = 'u8[8192]{0}', space=vmem, size = 0x2000, scoped, tag = 'output window, operand 0']
    %6 = vsyncpa [#allocation3], 0
    %s7 = scalar_lea.sflag [#allocation3], 1
    %8 = vsyncpa %s7, 0
    %9 = vsyncpa [#allocation4], 0
    %s10 = scalar_lea.sflag [#allocation4], 1
    %11 = vsyncpa %s10, 0
    loop: start=0, step=1, limit=4
    $region2: #{tpu_custom_call.1} parent=1 // loop_pre_header
      _
    $region3: #{tpu_custom_call.1} parent=1 // loop_header
      %s13 = sphi 0, %s17
      %p14 = scmp.ge.s32.totalorder %s13, 4
      %s23 = sphi 0, %s25
      %s26 = sphi 0, %s23
      %s27 = sphi 0, %s26
      %s43 = sphi 0, %s27
      %s49 = sphi 0, %s51
      %s52 = sphi 0, %s49
      %s53 = sphi 0, %s52
      %s69 = sphi 0, %s53
    $region4: #{tpu_custom_call.1} parent=1 // loop_header_branch
      %16 = sbr.rel (%p14) target = $region8
    $region5: #{tpu_custom_call.1} parent=1 // loop_body
      %s18 = ssub.s32 %s13, 1
      %s19 = ssub.s32 %s13, 2
      %s20 = sadd.s32 %s13, 1
      %s21 = ssub.s32 %s13, %s20
      %p22 = scmp.eq.s32.totalorder %s21, 0
      %s24 = sadd.s32 %s23, 1
      %s25 = scalar_select %p22, %s23, %s24
      %p28 = pneg %p22
      %p29 = scmp.eq.s32.totalorder %s13, 1
      %p30 = por %p28, %p29
      %p31 = scmp.ne.s32.totalorder %s23, %s26
      %p32 = scmp.eq.s32.totalorder %s13, 0
      %p33 = por %p31, %p32
      %p34 = scmp.ne.s32.totalorder %s23, %s26
      %p35 = scmp.eq.s32.totalorder %s18, 1
      %p36 = por %p34, %p35
      %p37 = scmp.ne.s32.totalorder %s26, %s27
      %p38 = scmp.eq.s32.totalorder %s18, 0
      %p39 = por %p37, %p38
      %p40 = scmp.ne.s32.totalorder %s26, %s27
      %p41 = scmp.eq.s32.totalorder %s19, 1
      %p42 = por %p40, %p41
      %p44 = scmp.ne.s32.totalorder %s27, %s43
      %p45 = scmp.eq.s32.totalorder %s19, 0
      %p46 = por %p44, %p45
      %s47 = ssub.s32 %s13, %s20
      %p48 = scmp.eq.s32.totalorder %s47, 0
      %s50 = sadd.s32 %s49, 1
      %s51 = scalar_select %p48, %s49, %s50
      %p54 = pneg %p48
      %p55 = scmp.eq.s32.totalorder %s13, 1
      %p56 = por %p54, %p55
      %p57 = scmp.ne.s32.totalorder %s49, %s52
      %p58 = scmp.eq.s32.totalorder %s13, 0
      %p59 = por %p57, %p58
      %p60 = scmp.ne.s32.totalorder %s49, %s52
      %p61 = scmp.eq.s32.totalorder %s18, 1
      %p62 = por %p60, %p61
      %p63 = scmp.ne.s32.totalorder %s52, %s53
      %p64 = scmp.eq.s32.totalorder %s18, 0
      %p65 = por %p63, %p64
      %p66 = scmp.ne.s32.totalorder %s52, %s53
      %p67 = scmp.eq.s32.totalorder %s19, 1
      %p68 = por %p66, %p67
      %p70 = scmp.ne.s32.totalorder %s53, %s69
      %p71 = scmp.eq.s32.totalorder %s19, 0
      %p72 = por %p70, %p71
      %p73 = scmp.le.s32.totalorder 1, %s13
      %p74 = scmp.lt.s32.totalorder %s13, 3
      %p75 = pnand %p73, %p74
      %p76 = pneg %p75
      // Predicated region
      $region9: #{tpu_custom_call.1} parent=5 // pred_check
        _
      $region10: #{tpu_custom_call.1} parent=5 // pred_check_branch
        %78 = sbr.rel (%p75) target = $region12
      $region11: #{tpu_custom_call.1} parent=5 // pred_region
        %s79 = ssub.s32 %s13, 1
      $region12: #{tpu_custom_call.1} parent=5 // pred_fallthru
        _
      %p80 = scmp.lt.s32.totalorder %s13, 2
      // Predicated region
      $region13: #{tpu_custom_call.1} parent=5 // pred_check
        %p81 = pneg %p80
      $region14: #{tpu_custom_call.1} parent=5 // pred_check_branch
        %83 = sbr.rel (%p81) target = $region16
      $region15: #{tpu_custom_call.1} parent=5 // pred_region
        // Predicated region
        $region17: #{tpu_custom_call.1} parent=15 // pred_check
          %p84 = pneg %p33
        $region18: #{tpu_custom_call.1} parent=15 // pred_check_branch
          %86 = sbr.rel (%p84) target = $region20
        $region19: #{tpu_custom_call.1} parent=15 // pred_region
          %s87 = sand.u32 %s23, 1
          %s88 = scalar_lea.sflag [#allocation3], %s87
          %s89 = sand.u32 %s23, 1
          %s90 = smul.addr %s89, 8
          %s91 = scalar_lea.vmem [#allocation2], %s90
          %s93 = ssub.s32 128, 128
          %94 = vsyncadd %s88, %s93
          %s95 = smul.addr %s13, 2
          %s96 = smul.addr %s95, 64
          %s97 = scalar_lea.hbm %s0, %s96
          %s99 = sshll.u32 %s91, 4
          %s100 = int_to_ptr.vmem [resolvable:$true] %s99
          %102 = dma.hbm_to_vmem [thread:$0]  %s97, 128, %s100, %s88
        $region20: #{tpu_custom_call.1} parent=15 // pred_fallthru
          _
      $region16: #{tpu_custom_call.1} parent=5 // pred_fallthru
        _
      %p103 = scmp.le.s32.totalorder 1, %s13
      %p104 = scmp.lt.s32.totalorder %s13, 3
      %p105 = pnand %p103, %p104
      %p106 = pneg %p105
      // Predicated region
      $region21: #{tpu_custom_call.1} parent=5 // pred_check
        _
      $region22: #{tpu_custom_call.1} parent=5 // pred_check_branch
        %108 = sbr.rel (%p105) target = $region24
      $region23: #{tpu_custom_call.1} parent=5 // pred_region
        %s109 = ssub.s32 %s13, 1
        %s110 = sand.u32 %s26, 1
        %s111 = scalar_lea.sflag [#allocation3], %s110
        %s112 = sand.u32 %s26, 1
        %s113 = smul.addr %s112, 8
        %s114 = scalar_lea.vmem [#allocation2], %s113
        // Predicated region
        $region25: #{tpu_custom_call.1} parent=23 // pred_check
          %p115 = pneg %p39
        $region26: #{tpu_custom_call.1} parent=23 // pred_check_branch
          %117 = sbr.rel (%p115) target = $region28
        $region27: #{tpu_custom_call.1} parent=23 // pred_region
          %118 = dma.done %s111, 128
        $region28: #{tpu_custom_call.1} parent=23 // pred_fallthru
          _
        %s119 = sand.u32 %s26, 1
        %s120 = scalar_lea.sflag [#allocation3], %s119
        %s121 = sand.u32 %s26, 1
        %s122 = smul.addr %s121, 8
        %s123 = scalar_lea.vmem [#allocation2], %s122
        %p124 = pneg %p39
        %p125 = pneg %p36
        %p126 = pneg %p65
        %p127 = pneg %p62
        %s128 = sand.u32 %s52, 1
        %s129 = scalar_lea.sflag [#allocation4], %s128
        %s130 = sand.u32 %s52, 1
        %s131 = smul.addr %s130, 8
        %s132 = scalar_lea.vmem [#allocation5], %s131
        %v133 = vlaneseq
        %v134 = vand.u32 %v133, 127
        %v135 = vadd.s32 %v134, 128
        %v136 = vld [vmem:[%s114] sm:$0xff]
        %v137 = vand.u32 %v134, 1
        %v138 = vand.u32 %v135, 1
        %vm139 = vcmp.eq.s32.totalorder %v137, 1
        %vm140 = vcmp.eq.s32.totalorder %v138, 1
        %v141 = vshra.s32 %v134, 1
        %v142 = vshra.s32 %v135, 1
        %v143 = vand.u32 %v141, 1
        %v144 = vand.u32 %v142, 1
        %vm145 = vcmp.eq.s32.totalorder %v143, 0
        %vm146 = vcmp.eq.s32.totalorder %v144, 0
        %vm147 = vmand %vm139, %vm145
        %vm148 = vmand %vm140, %vm146
        %v150 = vcombine.high %v136, %v136
        %151 = vrot.lane.b32.xlu0 %v136, 127
        %v152 = vpop.permute.xlu0 %151
        %153 = vrot.lane.b32.xlu0 %v150, 127
        %v154 = vpop.permute.xlu0 %153
        %vm155 = vcmask 1039360
        %v156 = vsel %vm155, %v152, %v154
        %v160 = vsel %vm155, %v154, %v152
        %v161 = vsel %vm147, 1, 0
        %v162 = vsel %vm148, 1, 0
        %vm163 = vcmp.eq.s32.totalorder %v161, 1
        %vm164 = vcmp.eq.s32.totalorder %v162, 1
        %v166 = vsel %vm163, %v156, %v136
        %v167 = vsel %vm164, %v160, %v150
        %vm168 = vcmp.eq.s32.totalorder %v143, 1
        %vm169 = vcmp.eq.s32.totalorder %v144, 1
        %v170 = vshra.s32 %v134, 2
        %v171 = vshra.s32 %v135, 2
        %v172 = vand.u32 %v170, 1
        %v173 = vand.u32 %v171, 1
        %vm174 = vcmp.eq.s32.totalorder %v172, 0
        %vm175 = vcmp.eq.s32.totalorder %v173, 0
        %vm176 = vmand %vm168, %vm174
        %vm177 = vmand %vm169, %vm175
        %180 = vrot.lane.b32.xlu0 %v166, 126
        %v181 = vpop.permute.xlu0 %180
        %182 = vrot.lane.b32.xlu0 %v167, 126
        %v183 = vpop.permute.xlu0 %182
        %vm184 = vcmask 1031168
        %v185 = vsel %vm184, %v181, %v183
        %v189 = vsel %vm184, %v183, %v181
        %v190 = vsel %vm176, 1, 0
        %v191 = vsel %vm177, 1, 0
        %vm192 = vcmp.eq.s32.totalorder %v190, 1
        %vm193 = vcmp.eq.s32.totalorder %v191, 1
        %v194 = vsel %vm192, %v185, %v166
        %v195 = vsel %vm193, %v189, %v167
        %vm196 = vcmp.eq.s32.totalorder %v172, 1
        %vm197 = vcmp.eq.s32.totalorder %v173, 1
        %v198 = vshra.s32 %v134, 3
        %v199 = vshra.s32 %v135, 3
        %v200 = vand.u32 %v198, 1
        %v201 = vand.u32 %v199, 1
        %vm202 = vcmp.eq.s32.totalorder %v200, 0
        %vm203 = vcmp.eq.s32.totalorder %v201, 0
        %vm204 = vmand %vm196, %vm202
        %vm205 = vmand %vm197, %vm203
        %208 = vrot.lane.b32.xlu0 %v194, 124
        %v209 = vpop.permute.xlu0 %208
        %210 = vrot.lane.b32.xlu0 %v195, 124
        %v211 = vpop.permute.xlu0 %210
        %vm212 = vcmask 1014784
        %v213 = vsel %vm212, %v209, %v211
        %v217 = vsel %vm212, %v211, %v209
        %v218 = vsel %vm204, 1, 0
        %v219 = vsel %vm205, 1, 0
        %vm220 = vcmp.eq.s32.totalorder %v218, 1
        %vm221 = vcmp.eq.s32.totalorder %v219, 1
        %v222 = vsel %vm220, %v213, %v194
        %v223 = vsel %vm221, %v217, %v195
        %v224 = vshra.s32 %v134, 4
        %v225 = vshra.s32 %v135, 4
        %v226 = vand.u32 %v224, 1
        %v227 = vand.u32 %v225, 1
        %vm228 = vcmp.eq.s32.totalorder %v226, 1
        %vm229 = vcmp.eq.s32.totalorder %v227, 1
        %v230 = vshra.s32 %v134, 5
        %v231 = vshra.s32 %v135, 5
        %v232 = vand.u32 %v230, 1
        %v233 = vand.u32 %v231, 1
        %vm234 = vcmp.eq.s32.totalorder %v232, 0
        %vm235 = vcmp.eq.s32.totalorder %v233, 0
        %vm236 = vmand %vm228, %vm234
        %vm237 = vmand %vm229, %vm235
        %240 = vrot.lane.b32.xlu0 %v222, 112
        %v241 = vpop.permute.xlu0 %240
        %242 = vrot.lane.b32.xlu0 %v223, 112
        %v243 = vpop.permute.xlu0 %242
        %vm244 = vcmask 916480
        %v245 = vsel %vm244, %v241, %v243
        %v249 = vsel %vm244, %v243, %v241
        %v250 = vsel %vm236, 1, 0
        %v251 = vsel %vm237, 1, 0
        %vm252 = vcmp.eq.s32.totalorder %v250, 1
        %vm253 = vcmp.eq.s32.totalorder %v251, 1
        %v254 = vsel %vm252, %v245, %v222
        %v255 = vsel %vm253, %v249, %v223
        %vm256 = vcmp.eq.s32.totalorder %v232, 1
        %vm257 = vcmp.eq.s32.totalorder %v233, 1
        %v258 = vshra.s32 %v134, 6
        %v259 = vshra.s32 %v135, 6
        %v260 = vand.u32 %v258, 1
        %v261 = vand.u32 %v259, 1
        %vm262 = vcmp.eq.s32.totalorder %v260, 0
        %vm263 = vcmp.eq.s32.totalorder %v261, 0
        %vm264 = vmand %vm256, %vm262
        %vm265 = vmand %vm257, %vm263
        %268 = vrot.lane.b32.xlu0 %v254, 96
        %v269 = vpop.permute.xlu0 %268
        %270 = vrot.lane.b32.xlu0 %v255, 96
        %v271 = vpop.permute.xlu0 %270
        %vm272 = vcmask 785408
        %v273 = vsel %vm272, %v269, %v271
        %v277 = vsel %vm272, %v271, %v269
        %v278 = vsel %vm264, 1, 0
        %v279 = vsel %vm265, 1, 0
        %vm280 = vcmp.eq.s32.totalorder %v278, 1
        %vm281 = vcmp.eq.s32.totalorder %v279, 1
        %v282 = vsel %vm280, %v273, %v254
        %v283 = vsel %vm281, %v277, %v255
        %vm284 = vcmp.eq.s32.totalorder %v260, 1
        %vm285 = vcmp.eq.s32.totalorder %v261, 1
        %v286 = vshra.s32 %v134, 7
        %v287 = vshra.s32 %v135, 7
        %v288 = vand.u32 %v286, 1
        %v289 = vand.u32 %v287, 1
        %vm290 = vcmp.eq.s32.totalorder %v288, 0
        %vm291 = vcmp.eq.s32.totalorder %v289, 0
        %vm292 = vmand %vm284, %vm290
        %vm293 = vmand %vm285, %vm291
        %296 = vrot.lane.b32.xlu0 %v282, 64
        %v297 = vpop.permute.xlu0 %296
        %298 = vrot.lane.b32.xlu0 %v283, 64
        %v299 = vpop.permute.xlu0 %298
        %vm300 = vcmask 523264
        %v301 = vsel %vm300, %v297, %v299
        %v305 = vsel %vm300, %v299, %v297
        %v306 = vsel %vm292, 1, 0
        %v307 = vsel %vm293, 1, 0
        %vm308 = vcmp.eq.s32.totalorder %v306, 1
        %vm309 = vcmp.eq.s32.totalorder %v307, 1
        %v310 = vsel %vm308, %v301, %v282
        %v311 = vsel %vm309, %v305, %v283
        %vm312 = vcmp.eq.s32.totalorder %v200, 1
        %vm313 = vcmp.eq.s32.totalorder %v201, 1
        %vm314 = vcmp.eq.s32.totalorder %v226, 0
        %vm315 = vcmp.eq.s32.totalorder %v227, 0
        %vm316 = vmand %vm312, %vm314
        %vm317 = vmand %vm313, %vm315
        %320 = vrot.lane.b32.xlu0 %v310, 120
        %v321 = vpop.permute.xlu0 %320
        %322 = vrot.lane.b32.xlu0 %v311, 120
        %v323 = vpop.permute.xlu0 %322
        %vm324 = vcmask 982016
        %v325 = vsel %vm324, %v321, %v323
        %v329 = vsel %vm324, %v323, %v321
        %v330 = vsel %vm316, 1, 0
        %v331 = vsel %vm317, 1, 0
        %vm332 = vcmp.eq.s32.totalorder %v330, 1
        %vm333 = vcmp.eq.s32.totalorder %v331, 1
        %v334 = vsel %vm332, %v325, %v310
        %v335 = vsel %vm333, %v329, %v311
        %338 = vrot.lane.b32.xlu0 %v334, 112
        %v339 = vpop.permute.xlu0 %338
        %340 = vrot.lane.b32.xlu0 %v335, 112
        %v341 = vpop.permute.xlu0 %340
        %v342 = vsel %vm244, %v339, %v341
        %v346 = vsel %vm244, %v341, %v339
        %v347 = vsel %vm252, %v342, %v334
        %v348 = vsel %vm253, %v346, %v335
        %351 = vrot.lane.b32.xlu0 %v347, 96
        %v352 = vpop.permute.xlu0 %351
        %353 = vrot.lane.b32.xlu0 %v348, 96
        %v354 = vpop.permute.xlu0 %353
        %v355 = vsel %vm272, %v352, %v354
        %v357 = vsel %vm280, %v355, %v347
        %vm358 = vcmask 517120
        %359 = vst.msk [vmem:[%s132] sm:$0x3] %vm358, 0.0
        %360 = vst.msk [vmem:[%s132 + $0x6] sm:$0x3] %vm358, 0.0
        %vm361 = vcmask 519168
        %362 = vst.msk [vmem:[%s132 + $0x2] sm:$0xf] %vm361, %v357
        %s363 = sand.u32 %s52, 1
        %s364 = scalar_lea.sflag [#allocation4], %s363
        %s365 = sand.u32 %s52, 1
        %s366 = smul.addr %s365, 8
        %s367 = scalar_lea.vmem [#allocation5], %s366
        // Predicated region
        $region29: #{tpu_custom_call.1} parent=23 // pred_check
          %p368 = pneg %p62
        $region30: #{tpu_custom_call.1} parent=23 // pred_check_branch
          %370 = sbr.rel (%p368) target = $region32
        $region31: #{tpu_custom_call.1} parent=23 // pred_region
          %s372 = ssub.s32 128, 128
          %373 = vsyncadd %s364, %s372
          %s374 = smul.addr %s18, 128
          %s375 = scalar_lea.hbm %s1, %s374
          %s377 = sshll.u32 %s367, 4
          %s378 = int_to_ptr.vmem [resolvable:$true] %s377
          %380 = dma.vmem_to_hbm [thread:$0]  %s378, 128, %s375, %s364
        $region32: #{tpu_custom_call.1} parent=23 // pred_fallthru
          _
      $region24: #{tpu_custom_call.1} parent=5 // pred_fallthru
        _
      %p381 = scmp.le.s32.totalorder 2, %s13
      // Predicated region
      $region33: #{tpu_custom_call.1} parent=5 // pred_check
        %p382 = pneg %p381
      $region34: #{tpu_custom_call.1} parent=5 // pred_check_branch
        %384 = sbr.rel (%p382) target = $region36
      $region35: #{tpu_custom_call.1} parent=5 // pred_region
        %s385 = ssub.s32 %s13, 2
        // Predicated region
        $region37: #{tpu_custom_call.1} parent=35 // pred_check
          %p386 = pneg %p68
        $region38: #{tpu_custom_call.1} parent=35 // pred_check_branch
          %388 = sbr.rel (%p386) target = $region40
        $region39: #{tpu_custom_call.1} parent=35 // pred_region
          %s389 = sand.u32 %s53, 1
          %s390 = scalar_lea.sflag [#allocation4], %s389
          %s391 = sand.u32 %s53, 1
          %s392 = smul.addr %s391, 8
          %s393 = scalar_lea.vmem [#allocation5], %s392
          %394 = dma.done %s390, 128
        $region40: #{tpu_custom_call.1} parent=35 // pred_fallthru
          _
      $region36: #{tpu_custom_call.1} parent=5 // pred_fallthru
        _
    $region6: #{tpu_custom_call.1} parent=1 // loop_footer
      %s17 = sadd.s32 1, %s13
    $region7: #{tpu_custom_call.1} parent=1 // loop_footer_branch
      %12 = sbr.rel target = $region3
    $region8: #{tpu_custom_call.1} parent=1 // loop_exit
      _
    %395 = vsyncpa [#allocation3], 1
    %s396 = scalar_lea.sflag [#allocation3], 1
    %397 = vsyncpa %s396, 1
    %398 = vsyncpa [#allocation4], 1
    %s399 = scalar_lea.sflag [#allocation4], 1
    %400 = vsyncpa %s399, 1

</llo_original>
